<compile_context>
chip_gen: v7x
topology: tpu7x:2x2x1
jax: 0.10.0
libtpu: 0.0.40
codegen_flags: <defaults>
</compile_context>

<pallas_src>
import functools

import jax
import jax.numpy as jnp
from jax.experimental import pallas as pl
from jax.experimental.pallas import tpu as pltpu


def _batchnorm_kernel(x_ref, gamma_ref, beta_ref, xhat_ref, logdet_ref,
                      *, eps, n, d_valid, td, resident_params):
    j = pl.program_id(0)
    col0 = pl.multiple_of(j * td, 128)

    x = x_ref[...].astype(jnp.float32)                               # (N, TD)

    if resident_params:
        # Parameters were loaded once as a resident (1, D_pad) row; slice the
        # lane-aligned window for this block.
        gamma = gamma_ref[:, pl.ds(col0, td)].astype(jnp.float32)    # (1, TD)
        beta = beta_ref[:, pl.ds(col0, td)].astype(jnp.float32)      # (1, TD)
    else:
        gamma = gamma_ref[...].astype(jnp.float32)                   # (1, TD)
        beta = beta_ref[...].astype(jnp.float32)                     # (1, TD)

    # Per-feature batch statistics (reduction over the sublane/batch axis).
    m = jnp.sum(x, axis=0, keepdims=True) * (1.0 / n)                # (1, TD)
    diff = x - m
    # Unbiased variance (torch.var default: divide by N-1), plus eps.
    v = jnp.sum(diff * diff, axis=0, keepdims=True) * (1.0 / (n - 1)) + eps

    # Fold the per-feature factors into a single row before broadcasting so
    # the (N, TD) elementwise work is one mul + one add.
    scale = jax.lax.rsqrt(v) * jnp.exp(gamma)                        # (1, TD)
    xhat_ref[...] = (diff * scale + beta).astype(xhat_ref.dtype)

    # Per-feature log-det contribution; mask lanes past the true feature dim
    # (ragged last block) so the wrapper-side sum sees exact zeros there.
    col = col0 + jax.lax.broadcasted_iota(jnp.int32, (1, td), 1)
    contrib = jnp.where(col < d_valid, gamma - 0.5 * jnp.log(v), 0.0)
    logdet_ref[...] = contrib


def batch_norm_layer(x, gamma, beta, eps=1e-5):
    """Pallas implementation of BatchNormLayer.forward (training mode).

    x:     (N, D)
    gamma: (1, D)
    beta:  (1, D)
    returns (x_hat (N, D), log_det scalar float32)
    """
    n, d = x.shape
    # TODO(synk): n == 1 divides by zero in the unbiased variance (1/(n-1)),
    # matching torch.var(unbiased=True); not guarded here.

    itemsize = jnp.dtype(x.dtype).itemsize
    param_itemsize = jnp.dtype(gamma.dtype).itemsize

    # Per-generation VMEM budget for the double-buffered (N, TD) in/out tiles:
    # ~1/4 of physical VMEM -> 16 MiB on v7x (64 MiB), 32 MiB on v5e/v6e.
    try:
        vmem_phys = int(pltpu.get_tpu_info().vmem_capacity_bytes)
    except Exception:
        vmem_phys = 64 * 1024 * 1024  # conservative (v7x-sized) fallback
    tile_budget = min(max(vmem_phys // 4, 8 << 20), 48 << 20)

    # --- Feature-tile selection (divisibility-free) -------------------------
    d_blocks_128 = pl.cdiv(d, 128)
    d_ceil128 = d_blocks_128 * 128
    td = None
    for cand in (32768, 16384, 8192, 4096, 2048, 1024, 512, 256, 128):
        if cand > d_ceil128 and cand != 128:
            continue  # wider than the (128-rounded) feature dim: wasteful
        # 2x-buffered input + 2x-buffered output (N, cand) tiles.
        if 4 * n * cand * itemsize <= tile_budget:
            td = cand
            break
    if td is None:
        # TODO(synk): very large N needs an N-tiled two-pass path (sum/sumsq
        # stats pass with an "arbitrary" N axis, then a normalize pass).
        raise ValueError(
            f"batch_norm_layer: batch size {n} too large for a single-pass "
            f"feature-tiled kernel within the {tile_budget >> 20} MiB VMEM "
            f"tile budget")

    num_blocks = pl.cdiv(d, td)

    # Megacore (v7x): if D spans more than one 128-lane tile but collapsed to
    # a single block, split into >= 2 blocks so the "parallel" grid axis can
    # shard across both TensorCores.  Costs one extra (cheap) grid step on
    # single-core generations.
    if num_blocks == 1 and d_blocks_128 >= 2:
        td = pl.cdiv(d_blocks_128, 2) * 128
        num_blocks = pl.cdiv(d, td)

    d_pad = num_blocks * td

    # Pad only the tiny (1, D) parameter rows so in-kernel parameter reads are
    # always in-bounds; x itself is NOT padded (ragged last block handled by
    # Pallas boundary clipping + the log_det iota mask).
    if d_pad != d:
        gamma_p = jnp.pad(gamma, ((0, 0), (0, d_pad - d)))
        beta_p = jnp.pad(beta, ((0, 0), (0, d_pad - d)))
    else:
        gamma_p, beta_p = gamma, beta

    # Load gamma/beta once (constant index_map) when the resident row is small;
    # fall back to per-block parameter tiles for very large D.
    params_resident = d_pad * param_itemsize * 4 <= (2 << 20)
    if params_resident:
        param_spec = pl.BlockSpec((1, d_pad), lambda j: (0, 0))
    else:
        param_spec = pl.BlockSpec((1, td), lambda j: (0, j))

    kernel = functools.partial(
        _batchnorm_kernel, eps=float(eps), n=int(n), d_valid=int(d),
        td=int(td), resident_params=bool(params_resident))

    # Advisory cost estimate.
    cost = pl.CostEstimate(
        flops=8 * n * d,
        transcendentals=3 * d,
        bytes_accessed=2 * n * d * itemsize + 2 * d * param_itemsize + d * 4,
    )

    # Tight, portable VMEM limit: actual double-buffered usage with ~2x
    # headroom, floored at 16 MiB and capped well under physical VMEM.
    param_block_elems = d_pad if params_resident else td
    vmem_used = (4 * n * td * itemsize                      # x in + x_hat out, 2x buffered
                 + 4 * param_block_elems * param_itemsize   # gamma + beta
                 + 2 * td * 4)                              # log_det row, 2x buffered
    vmem_limit = int(min(max(2 * vmem_used + (2 << 20), 16 << 20),
                         int(0.75 * vmem_phys)))

    x_hat, logdet_contrib = pl.pallas_call(
        kernel,
        out_shape=(
            jax.ShapeDtypeStruct((n, d), x.dtype),
            jax.ShapeDtypeStruct((1, d), jnp.float32),
        ),
        grid=(num_blocks,),
        in_specs=[
            pl.BlockSpec((n, td), lambda j: (0, j)),
            param_spec,
            param_spec,
        ],
        out_specs=(
            pl.BlockSpec((n, td), lambda j: (0, j)),
            pl.BlockSpec((1, td), lambda j: (0, j)),
        ),
        compiler_params=pltpu.CompilerParams(
            dimension_semantics=("parallel",),
            vmem_limit_bytes=vmem_limit,
        ),
        cost_estimate=cost,
    )(x, gamma_p, beta_p)

    log_det = jnp.sum(logdet_contrib)
    return x_hat, log_det


def _reference(x, gamma, beta, eps):
    m = jnp.mean(x, axis=0, keepdims=True)
    v = jnp.var(x, axis=0, ddof=1, keepdims=True) + eps
    x_hat = (x - m) / jnp.sqrt(v) * jnp.exp(gamma) + beta
    log_det = jnp.sum(gamma - 0.5 * jnp.log(v))
    return x_hat, log_det


if __name__ == "__main__":
    key = jax.random.PRNGKey(0)
    kx, kg, kb, kx2 = jax.random.split(key, 4)

    # Case 1: module __init__ parameters (zeros), D < 128 (single ragged block).
    batch, dim = 8, 32
    x = jax.random.normal(kx, (batch, dim), dtype=jnp.float32)
    gamma0 = jnp.zeros((1, dim), dtype=jnp.float32)
    beta0 = jnp.zeros((1, dim), dtype=jnp.float32)
    x_hat0, log_det0 = batch_norm_layer(x, gamma0, beta0, eps=1e-5)
    jax.block_until_ready((x_hat0, log_det0))
    xr0, ldr0 = _reference(x, gamma0, beta0, 1e-5)
    assert jnp.allclose(x_hat0, xr0, atol=1e-5, rtol=1e-5)
    assert jnp.allclose(log_det0, ldr0, atol=1e-5, rtol=1e-5)

    # Case 2: non-trivial parameters, D not a multiple of 128 -> multi-block
    # grid with a ragged last block (exercises the megacore split + masking).
    dim2 = 160
    x2 = jax.random.normal(kx2, (batch, dim2), dtype=jnp.float32)
    gamma1 = 0.1 * jax.random.normal(kg, (1, dim2), dtype=jnp.float32)
    beta1 = 0.1 * jax.random.normal(kb, (1, dim2), dtype=jnp.float32)
    x_hat1, log_det1 = batch_norm_layer(x2, gamma1, beta1, eps=1e-5)
    jax.block_until_ready((x_hat1, log_det1))
    xr1, ldr1 = _reference(x2, gamma1, beta1, 1e-5)
    assert jnp.allclose(x_hat1, xr1, atol=1e-5, rtol=1e-5)
    assert jnp.allclose(log_det1, ldr1, atol=1e-5, rtol=1e-5)

    print("KERNEL_OK")
</pallas_src>

<mosaic_0001>
module attributes {stable_mosaic.version = 11 : i64} {
  func.func @_batchnorm_kernel(%arg0: i32, %arg1: memref<8x128xf32, #tpu.memory_space<vmem>>, %arg2: memref<1x128xf32, #tpu.memory_space<vmem>>, %arg3: memref<1x128xf32, #tpu.memory_space<vmem>>, %arg4: memref<8x128xf32, #tpu.memory_space<vmem>>, %arg5: memref<1x128xf32, #tpu.memory_space<vmem>>) attributes {dimension_semantics = [#tpu.dimension_semantics<parallel>], iteration_bounds = array<i64: 1>, scalar_prefetch = 0 : i64, scratch_operands = 0 : i64, tpu.core_type = #tpu.core_type<tc>, window_params = [{transform_indices = @transform_0, window_bounds = array<i64: 8, 128>}, {pipeline_mode = #tpu.pipeline_mode<synchronous>, transform_indices = @transform_1, window_bounds = array<i64: 1, 128>}, {pipeline_mode = #tpu.pipeline_mode<synchronous>, transform_indices = @transform_2, window_bounds = array<i64: 1, 128>}, {transform_indices = @transform_3, window_bounds = array<i64: 8, 128>}, {transform_indices = @transform_4, window_bounds = array<i64: 1, 128>}]} {
    %c128_i32 = arith.constant 128 : i32
    %0 = arith.muli %arg0, %c128_i32 : i32
    %1 = tpu.assume_multiple %0, 128 : i32
    %c0 = arith.constant 0 : index
    %c0_0 = arith.constant 0 : index
    %2 = vector.load %arg1[%c0, %c0_0] : memref<8x128xf32, #tpu.memory_space<vmem>>, vector<8x128xf32>
    %c0_1 = arith.constant 0 : index
    %3 = arith.index_cast %1 : i32 to index
    %4 = vector.load %arg2[%c0_1, %3] : memref<1x128xf32, #tpu.memory_space<vmem>>, vector<1x128xf32>
    %c0_2 = arith.constant 0 : index
    %5 = arith.index_cast %1 : i32 to index
    %6 = vector.load %arg3[%c0_2, %5] : memref<1x128xf32, #tpu.memory_space<vmem>>, vector<1x128xf32>
    %cst = arith.constant dense<0.000000e+00> : vector<128xf32>
    %7 = vector.multi_reduction <add>, %2, %cst [0] : vector<8x128xf32> to vector<128xf32>
    %8 = vector.shape_cast %7 : vector<128xf32> to vector<1x128xf32>
    %cst_3 = arith.constant 1.250000e-01 : f32
    %9 = vector.broadcast %cst_3 : f32 to vector<1x128xf32>
    %10 = arith.mulf %8, %9 : vector<1x128xf32>
    %11 = vector.broadcast %10 : vector<1x128xf32> to vector<8x128xf32>
    %12 = arith.subf %2, %11 : vector<8x128xf32>
    %13 = arith.mulf %12, %12 : vector<8x128xf32>
    %cst_4 = arith.constant dense<0.000000e+00> : vector<128xf32>
    %14 = vector.multi_reduction <add>, %13, %cst_4 [0] : vector<8x128xf32> to vector<128xf32>
    %15 = vector.shape_cast %14 : vector<128xf32> to vector<1x128xf32>
    %cst_5 = arith.constant 0.142857149 : f32
    %16 = vector.broadcast %cst_5 : f32 to vector<1x128xf32>
    %17 = arith.mulf %15, %16 : vector<1x128xf32>
    %cst_6 = arith.constant 9.99999974E-6 : f32
    %18 = vector.broadcast %cst_6 : f32 to vector<1x128xf32>
    %19 = arith.addf %17, %18 : vector<1x128xf32>
    %20 = math.rsqrt %19 : vector<1x128xf32>
    %21 = math.exp %4 : vector<1x128xf32>
    %22 = arith.mulf %20, %21 : vector<1x128xf32>
    %23 = vector.broadcast %22 : vector<1x128xf32> to vector<8x128xf32>
    %24 = arith.mulf %12, %23 : vector<8x128xf32>
    %25 = vector.broadcast %6 : vector<1x128xf32> to vector<8x128xf32>
    %26 = arith.addf %24, %25 : vector<8x128xf32>
    %c0_7 = arith.constant 0 : index
    %c0_8 = arith.constant 0 : index
    %27 = vector.load %arg4[%c0_7, %c0_8] : memref<8x128xf32, #tpu.memory_space<vmem>>, vector<8x128xf32>
    tpu.vector_store %arg4[%c0_7, %c0_8], %26 {strides = array<i32>} : memref<8x128xf32, #tpu.memory_space<vmem>>, vector<8x128xf32>,
    %28 = tpu.iota {dimensions = array<i32: 1>} : vector<1x128xi32>
    %29 = vector.broadcast %1 : i32 to vector<1x128xi32>
    %30 = arith.addi %29, %28 : vector<1x128xi32>
    %c32_i32 = arith.constant 32 : i32
    %31 = vector.broadcast %c32_i32 : i32 to vector<1x128xi32>
    %32 = arith.cmpi slt, %30, %31 : vector<1x128xi32>
    %33 = math.log %19 : vector<1x128xf32>
    %cst_9 = arith.constant 5.000000e-01 : f32
    %34 = vector.broadcast %cst_9 : f32 to vector<1x128xf32>
    %35 = arith.mulf %34, %33 : vector<1x128xf32>
    %36 = arith.subf %4, %35 : vector<1x128xf32>
    %cst_10 = arith.constant 0.000000e+00 : f32
    %37 = vector.broadcast %cst_10 : f32 to vector<1x128xf32>
    %38 = arith.select %32, %36, %37 : vector<1x128xi1>, vector<1x128xf32>
    %c0_11 = arith.constant 0 : index
    %c0_12 = arith.constant 0 : index
    %39 = vector.load %arg5[%c0_11, %c0_12] : memref<1x128xf32, #tpu.memory_space<vmem>>, vector<1x128xf32>
    tpu.vector_store %arg5[%c0_11, %c0_12], %38 {strides = array<i32>} : memref<1x128xf32, #tpu.memory_space<vmem>>, vector<1x128xf32>,
    return
  }
  func.func @transform_0(%arg0: i32) -> (i32, i32) {
    %c0_i32 = arith.constant 0 : i32
    %c0_i32_0 = arith.constant 0 : i32
    return %c0_i32, %arg0 : i32, i32
  }
  func.func @transform_1(%arg0: i32) -> (i32, i32) {
    %c0_i32 = arith.constant 0 : i32
    %c0_i32_0 = arith.constant 0 : i32
    %c0_i32_1 = arith.constant 0 : i32
    return %c0_i32, %c0_i32_0 : i32, i32
  }
  func.func @transform_2(%arg0: i32) -> (i32, i32) {
    %c0_i32 = arith.constant 0 : i32
    %c0_i32_0 = arith.constant 0 : i32
    %c0_i32_1 = arith.constant 0 : i32
    return %c0_i32, %c0_i32_0 : i32, i32
  }
  func.func @transform_3(%arg0: i32) -> (i32, i32) {
    %c0_i32 = arith.constant 0 : i32
    %c0_i32_0 = arith.constant 0 : i32
    return %c0_i32, %arg0 : i32, i32
  }
  func.func @transform_4(%arg0: i32) -> (i32, i32) {
    %c0_i32 = arith.constant 0 : i32
    %c0_i32_0 = arith.constant 0 : i32
    return %c0_i32, %arg0 : i32, i32
  }
}

</mosaic_0001>

<llo_original>
// kernel: tpu_custom_call.1
$region0: #{tpu_custom_call.1}
  #allocation0 [shape = 'u32[]', space=smem, size = 0x4, offset = 0x4, fixed_abs, tag = 'smem constant byte address 0x4 - core index']
  #allocation1 [shape = 'u32[144,128]{1,0:T(1,128)}', space=vmem, size = 0x12000, scoped, tag = 'internal scratch']
  %s0 = inlined_call_operand.hbm [shape: f32[8,32], index: 0, kind: input, shape index: {}]
  %s1 = inlined_call_operand.vmem [shape: f32[1,128], index: 1, kind: input, shape index: {}]
  %s2 = inlined_call_operand.vmem [shape: f32[1,128], index: 2, kind: input, shape index: {}]
  %s3 = inlined_call_operand.hbm [shape: f32[8,32], index: 3, kind: output, shape index: {0}]
  %s4 = inlined_call_operand.hbm [shape: f32[1,32], index: 4, kind: output, shape index: {1}]
  %5 = xla_tuple %s3, %s4
  %s6 = sld [smem:[#allocation0]]
  $region34: #{tpu_custom_call.1} parent=0
    _
  %s8 = ssub.s32 1, %s6
  %s9 = scalar_select 0, %s8, %s6
  $region1: #{tpu_custom_call.1} parent=0
    #allocation2 [shape = 'u8[4096]{0}', space=vmem, size = 0x1000, scoped, tag = 'input window, operand 0, single buffered']
    #allocation3 [shape = 's32[1]{0}', space=sflag, size = 0x4, scoped, tag = 'scoped memory for tpu_custom_call.1']
    #allocation4 [shape = 's32[1]{0}', space=sflag, size = 0x4, scoped, tag = 'scoped memory for tpu_custom_call.1']
    #allocation5 [shape = 'u8[4096]{0}', space=vmem, size = 0x1000, scoped, tag = 'output window, operand 0, single buffered']
    #allocation6 [shape = 'u8[512]{0}', space=vmem, size = 0x400, scoped, tag = 'output window, operand 1, single buffered']
    #allocation7 [shape = 's32[1]{0}', space=sflag, size = 0x4, scoped, tag = 'scoped memory for tpu_custom_call.1']
    %10 = vsyncpa [#allocation3], 0
    %11 = vsyncpa [#allocation4], 0
    %12 = vsyncpa [#allocation7], 0
    // Predicated region
    $region2: #{tpu_custom_call.1} parent=1 // pred_check
      _
    $region3: #{tpu_custom_call.1} parent=1 // pred_check_branch
      %14 = sbr.rel (0) target = $region5
    $region4: #{tpu_custom_call.1} parent=1 // pred_region
      %s16 = ssub.s32 128, 128
      %17 = vsyncadd [#allocation3], %s16
      %s19 = sshll.u32 [#allocation2], 4
      %s20 = int_to_ptr.vmem [resolvable:$true] %s19
      %22 = dma.hbm_to_vmem [thread:$0]  %s0, 128, %s20, [#allocation3]
    $region5: #{tpu_custom_call.1} parent=1 // pred_fallthru
      _
    // Predicated region
    $region6: #{tpu_custom_call.1} parent=1 // pred_check
      _
    $region7: #{tpu_custom_call.1} parent=1 // pred_check_branch
      %24 = sbr.rel (0) target = $region9
    $region8: #{tpu_custom_call.1} parent=1 // pred_region
      _
    $region9: #{tpu_custom_call.1} parent=1 // pred_fallthru
      _
    // Predicated region
    $region10: #{tpu_custom_call.1} parent=1 // pred_check
      _
    $region11: #{tpu_custom_call.1} parent=1 // pred_check_branch
      %26 = sbr.rel (0) target = $region13
    $region12: #{tpu_custom_call.1} parent=1 // pred_region
      _
    $region13: #{tpu_custom_call.1} parent=1 // pred_fallthru
      _
    // Predicated region
    $region14: #{tpu_custom_call.1} parent=1 // pred_check
      _
    $region15: #{tpu_custom_call.1} parent=1 // pred_check_branch
      %28 = sbr.rel (0) target = $region17
    $region16: #{tpu_custom_call.1} parent=1 // pred_region
      %29 = dma.done [#allocation3], 128
    $region17: #{tpu_custom_call.1} parent=1 // pred_fallthru
      _
    %s30 = smul.u32 0, 128
    %v31 = vld [vmem:[#allocation2] sm:$0xff]
    %s32 = sshra.s32 %s30, 7
    %s33 = sand.u32 %s30, 127
    %s34 = scalar_lea.vmem %s1, %s32
    %v35 = vld [vmem:[%s34] sm:$0x1]
    %s36 = scalar_lea.vmem %s2, %s32
    %v37 = vld [vmem:[%s36] sm:$0x1]
    %v38 = vrot.slane %v31, 4
    %v39 = vadd.f32 %v31, %v38
    %v40 = vrot.slane %v39, 2
    %v41 = vadd.f32 %v39, %v40
    %v42 = vrot.slane %v41, 1
    %v43 = vadd.f32 %v41, %v42
    %v44 = vmul.f32 %v43, 0.125
    %v45 = vsub.f32 %v31, %v44
    %v46 = vmul.f32 %v45, %v45
    %v47 = vrot.slane %v46, 4
    %v48 = vadd.f32 %v46, %v47
    %v49 = vrot.slane %v48, 2
    %v50 = vadd.f32 %v48, %v49
    %v51 = vrot.slane %v50, 1
    %v52 = vadd.f32 %v50, %v51
    %v53 = vmul.f32 %v52, 0.14285715
    %v54 = vadd.f32 %v53, 1e-05
    %v55 = vrsqrt.pop %v54
    %v56 = vmul.f32 %v35, 1.442695
    %v57 = vpow.pop %v56
    %v58 = vmul.f32 %v55, %v57
    %v59 = vlaneseq
    %v60 = vshrl.u32 %v59, 7
    %v61 = vsub.s32 0, %v60
    %v62 = vrot.slane %v58, %v61
    %v63 = vmul.f32 %v45, %v62
    %v65 = vlaneseq
    %v66 = vshrl.u32 %v65, 7
    %v67 = vsub.s32 0, %v66
    %v68 = vrot.slane %v37, %v67
    %v70 = vadd.f32 %v63, %v68
    %71 = vst [vmem:[#allocation5] sm:$0xff] %v70
    %v72 = vlaneseq
    %v73 = vand.u32 %v72, 127
    %v74 = vstv %s30
    %v75 = vadd.s32 %v74, %v73
    %vm76 = vcmp.lt.s32.totalorder %v75, 32
    %v77 = vlog2.pop %v54
    %v78 = vmul.f32 %v77, 0.6931472
    %v79 = vmul.f32 %v78, 0.5
    %v80 = vsub.f32 %v35, %v79
    %v81 = vsel %vm76, %v80, 0.0
    %82 = vst [vmem:[#allocation6] sm:$0x1] %v81
    // Predicated region
    $region18: #{tpu_custom_call.1} parent=1 // pred_check
      _
    $region19: #{tpu_custom_call.1} parent=1 // pred_check_branch
      %84 = sbr.rel (0) target = $region21
    $region20: #{tpu_custom_call.1} parent=1 // pred_region
      %s86 = ssub.s32 128, 128
      %87 = vsyncadd [#allocation4], %s86
      %s89 = sshll.u32 [#allocation5], 4
      %s90 = int_to_ptr.vmem [resolvable:$true] %s89
      %92 = dma.vmem_to_hbm [thread:$0]  %s90, 128, %s3, [#allocation4]
    $region21: #{tpu_custom_call.1} parent=1 // pred_fallthru
      _
    // Predicated region
    $region22: #{tpu_custom_call.1} parent=1 // pred_check
      _
    $region23: #{tpu_custom_call.1} parent=1 // pred_check_branch
      %94 = sbr.rel (0) target = $region25
    $region24: #{tpu_custom_call.1} parent=1 // pred_region
      %s96 = ssub.s32 16, 16
      %97 = vsyncadd [#allocation7], %s96
      %s99 = sshll.u32 [#allocation6], 4
      %s100 = int_to_ptr.vmem [resolvable:$true] %s99
      %102 = dma.vmem_to_hbm [thread:$0]  %s100, 16, %s4, [#allocation7]
    $region25: #{tpu_custom_call.1} parent=1 // pred_fallthru
      _
    // Predicated region
    $region26: #{tpu_custom_call.1} parent=1 // pred_check
      _
    $region27: #{tpu_custom_call.1} parent=1 // pred_check_branch
      %104 = sbr.rel (0) target = $region29
    $region28: #{tpu_custom_call.1} parent=1 // pred_region
      %105 = dma.done [#allocation4], 128
    $region29: #{tpu_custom_call.1} parent=1 // pred_fallthru
      _
    // Predicated region
    $region30: #{tpu_custom_call.1} parent=1 // pred_check
      _
    $region31: #{tpu_custom_call.1} parent=1 // pred_check_branch
      %107 = sbr.rel (0) target = $region33
    $region32: #{tpu_custom_call.1} parent=1 // pred_region
      %108 = dma.done [#allocation7], 16
    $region33: #{tpu_custom_call.1} parent=1 // pred_fallthru
      _
    %109 = vsyncpa [#allocation3], 1
    %110 = vsyncpa [#allocation4], 1
    %111 = vsyncpa [#allocation7], 1

</llo_original>
